<compile_context>
chip_gen: v7x
topology: tpu7x:2x2x1
jax: 0.10.0
libtpu: 0.0.40
codegen_flags: <defaults>
</compile_context>

<pallas_src>
import functools

import jax
import jax.numpy as jnp
from jax.experimental import pallas as pl
from jax.experimental.pallas import tpu as pltpu


def _prenorm_kernel(x_ref, w_ref, b_ref, o_ref, xn_ref, *, eps, inv_d):
    """One (tm, tn) output tile.  LayerNorm stats computed once per row tile
    (at j == 0) into the xn scratch; every column tile reuses it on the MXU."""

    @pl.when(pl.program_id(1) == 0)
    def _():
        x = x_ref[...].astype(jnp.float32)                      # (tm, D)
        s1 = jnp.sum(x, axis=-1, keepdims=True)                 # single fused pass
        s2 = jnp.sum(x * x, axis=-1, keepdims=True)
        mean = s1 * inv_d
        var = jnp.maximum(s2 * inv_d - mean * mean, 0.0)        # clamp cancellation
        inv_std = jax.lax.rsqrt(var + eps)
        xn_ref[...] = ((x - mean) * inv_std).astype(xn_ref.dtype)

    # fn = Linear(dim, dim) with folded-in affine; bf16 operands, f32 accumulate.
    y = jnp.dot(xn_ref[...], w_ref[...], preferred_element_type=jnp.float32)
    o_ref[...] = (y + b_ref[...].astype(jnp.float32)).astype(o_ref.dtype)


def _round_up(x, m):
    return ((x + m - 1) // m) * m


def _pick_tiles(M, D, x_itemsize, w_itemsize):
    """Choose (tm, tn) row/column tile sizes and the VMEM limit.

    Accounts for: double-buffered x (tm, D) and out (tm, tn) tiles, the
    (tm, D) xn scratch, ~12 B/elem of live f32 intermediates during the stats
    pass, and the double-buffered (D, tn) weight block + bias."""
    # Generation-aware VMEM capacity (v5e/v6e: 128 MiB, v7x: 64 MiB per TC).
    try:
        cap = int(pltpu.get_tpu_info().vmem_capacity_bytes)
    except Exception:
        cap = 64 * 1024 * 1024                      # conservative (v7x)
    budget = int(cap * 0.60)
    vmem_limit = max(32 << 20, min(int(cap * 0.85), 128 << 20))

    gran = 16 if x_itemsize < 4 else 8              # sublane granularity of x

    # ---- output-column tile tn: weight block (D, tn) is double-buffered ----
    if D <= 256 or 2 * D * D * w_itemsize <= budget // 2:
        tn = D                                       # weight fully resident
    else:
        tn = (budget // 2) // (2 * D * w_itemsize)
        tn = max(256, (tn // 256) * 256)             # MXU-shaped, lane-dense
        tn = min(tn, D)
    grid_n = pl.cdiv(D, tn)

    w_bytes = 2 * D * tn * w_itemsize + 2 * tn * 4   # weight + bias blocks

    # ---- row tile tm ----
    per_row = (2 * D * x_itemsize                    # x double buffer
               + 2 * tn * x_itemsize                 # out double buffer
               + D * w_itemsize                      # xn scratch (mxu dtype)
               + 12 * D)                             # live f32 intermediates
    avail = max(budget - w_bytes, 1 << 20)
    tm = max(gran, avail // per_row)
    tm = min(tm, 1024, _round_up(M, gran))
    if tm >= 256:
        tm = (tm // 256) * 256                       # MXU-edge-shaped row tiles
    else:
        tm = max(gran, (tm // gran) * gran)
    # Keep >= 2 row tiles on small problems so v7x's second TC gets work.
    if pl.cdiv(M, tm) < 2 and M > gran:
        tm = max(gran, _round_up(pl.cdiv(M, 2), gran))
    grid_m = pl.cdiv(M, tm)
    return tm, tn, grid_m, grid_n, vmem_limit


def prenorm_linear(x, gamma, beta, w, b, *, eps=1e-5, mxu_dtype=jnp.bfloat16):
    """x: (B, N, D) -> (B, N, D).  LayerNorm over D, then x @ w + b (fused)."""
    B, N, D = x.shape
    M = B * N
    x2 = x.reshape(M, D)

    # Fold the LayerNorm affine into the projection (exact in real arithmetic).
    w_f = gamma.astype(jnp.float32)[:, None] * w.astype(jnp.float32)
    b_f = (beta.astype(jnp.float32) @ w.astype(jnp.float32)
           + b.astype(jnp.float32)).reshape(1, D)
    if mxu_dtype is None:
        mxu_dtype = w.dtype
    w_f = w_f.astype(mxu_dtype)                      # bf16 MXU operands by default

    x_item = jnp.dtype(x.dtype).itemsize
    w_item = jnp.dtype(mxu_dtype).itemsize
    tm, tn, grid_m, grid_n, vmem_limit = _pick_tiles(M, D, x_item, w_item)

    w_reads = grid_m if grid_n > 1 else 1
    cost = pl.CostEstimate(
        flops=2 * M * D * D + 8 * M * D,
        transcendentals=M,                           # rsqrt per row
        bytes_accessed=2 * M * D * x_item + w_reads * D * D * w_item + 4 * D,
    )

    out = pl.pallas_call(
        functools.partial(_prenorm_kernel, eps=float(eps), inv_d=1.0 / float(D)),
        out_shape=jax.ShapeDtypeStruct((M, D), x.dtype),
        grid_spec=pltpu.PrefetchScalarGridSpec(
            num_scalar_prefetch=0,
            grid=(grid_m, grid_n),
            in_specs=[
                pl.BlockSpec((tm, D), lambda i, j: (i, 0)),    # x rows (streamed)
                pl.BlockSpec((D, tn), lambda i, j: (0, j)),    # folded weight cols
                pl.BlockSpec((1, tn), lambda i, j: (0, j)),    # folded bias
            ],
            out_specs=pl.BlockSpec((tm, tn), lambda i, j: (i, j)),
            scratch_shapes=[pltpu.VMEM((tm, D), mxu_dtype)],   # cached xn rows
        ),
        compiler_params=pltpu.CompilerParams(
            dimension_semantics=("parallel", "arbitrary"),     # v7x dual-TC rows
            vmem_limit_bytes=vmem_limit,
        ),
        cost_estimate=cost,
    )(x2, w_f, b_f)

    return out.reshape(B, N, D)


def prenorm_reference(x, gamma, beta, w, b, *, eps=1e-5):
    xf = x.astype(jnp.float32)
    mean = jnp.mean(xf, axis=-1, keepdims=True)
    var = jnp.mean((xf - mean) ** 2, axis=-1, keepdims=True)
    xn = (xf - mean) * jax.lax.rsqrt(var + eps)
    xn = xn * gamma.astype(jnp.float32) + beta.astype(jnp.float32)
    y = xn @ w.astype(jnp.float32) + b.astype(jnp.float32)
    return y.astype(x.dtype)


if __name__ == "__main__":
    key = jax.random.PRNGKey(0)
    B, N, D = 2, 8, 32   # batch, seq, hidden (small demo shape)

    kx, kw, kb = jax.random.split(key, 3)
    x = jax.random.normal(kx, (B, N, D), dtype=jnp.float32)

    # LayerNorm params: PyTorch default init (ones / zeros).
    gamma = jnp.ones((D,), dtype=jnp.float32)
    beta = jnp.zeros((D,), dtype=jnp.float32)

    # fn = Linear(D, D): deterministic synthetic weights (math layout: y = x @ w + b).
    w = jax.random.normal(kw, (D, D), dtype=jnp.float32) * (1.0 / jnp.sqrt(D))
    b = jax.random.normal(kb, (D,), dtype=jnp.float32) * 0.01

    out = prenorm_linear(x, gamma, beta, w, b)
    out = jax.block_until_ready(out)

    ref = prenorm_reference(x, gamma, beta, w, b)
    assert out.shape == (B, N, D)
    # Tolerance accounts for bf16 MXU operands (f32 accumulate) in the kernel.
    assert jnp.allclose(out, ref, atol=5e-2, rtol=5e-2), \
        f"max abs err {jnp.max(jnp.abs(out - ref))}"

    print("KERNEL_OK")
</pallas_src>

<mosaic_0001>
module attributes {stable_mosaic.version = 11 : i64} {
  func.func @_prenorm_kernel(%arg0: i32, %arg1: i32, %arg2: memref<8x32xf32, #tpu.memory_space<vmem>>, %arg3: memref<32x32xbf16, #tpu.memory_space<vmem>>, %arg4: memref<1x32xf32, #tpu.memory_space<vmem>>, %arg5: memref<8x32xf32, #tpu.memory_space<vmem>>, %arg6: memref<8x32xbf16, #tpu.memory_space<vmem>>) attributes {dimension_semantics = [#tpu.dimension_semantics<parallel>, #tpu.dimension_semantics<arbitrary>], iteration_bounds = array<i64: 2, 1>, scalar_prefetch = 0 : i64, scratch_operands = 1 : i64, tpu.core_type = #tpu.core_type<tc>, window_params = [{transform_indices = @transform_0, window_bounds = array<i64: 8, 32>}, {transform_indices = @transform_1, window_bounds = array<i64: 32, 32>}, {transform_indices = @transform_2, window_bounds = array<i64: 1, 32>}, {transform_indices = @transform_3, window_bounds = array<i64: 8, 32>}]} {
    %c0_i32 = arith.constant 0 : i32
    %0 = arith.cmpi eq, %arg1, %c0_i32 : i32
    %1 = arith.extui %0 : i1 to i32
    %c0_i32_0 = arith.constant 0 : i32
    %2 = arith.cmpi ne, %1, %c0_i32_0 : i32
    scf.if %2 {
      %c0_8 = arith.constant 0 : index
      %c0_9 = arith.constant 0 : index
      %10 = vector.load %arg2[%c0_8, %c0_9] : memref<8x32xf32, #tpu.memory_space<vmem>>, vector<8x32xf32>
      %cst_10 = arith.constant dense<0.000000e+00> : vector<8xf32>
      %11 = vector.multi_reduction <add>, %10, %cst_10 [1] : vector<8x32xf32> to vector<8xf32>
      %12 = vector.shape_cast %11 : vector<8xf32> to vector<8x1xf32>
      %13 = arith.mulf %10, %10 : vector<8x32xf32>
      %cst_11 = arith.constant dense<0.000000e+00> : vector<8xf32>
      %14 = vector.multi_reduction <add>, %13, %cst_11 [1] : vector<8x32xf32> to vector<8xf32>
      %15 = vector.shape_cast %14 : vector<8xf32> to vector<8x1xf32>
      %cst_12 = arith.constant 3.125000e-02 : f32
      %16 = vector.broadcast %cst_12 : f32 to vector<8x1xf32>
      %17 = arith.mulf %12, %16 : vector<8x1xf32>
      %cst_13 = arith.constant 3.125000e-02 : f32
      %18 = vector.broadcast %cst_13 : f32 to vector<8x1xf32>
      %19 = arith.mulf %15, %18 : vector<8x1xf32>
      %20 = arith.mulf %17, %17 : vector<8x1xf32>
      %21 = arith.subf %19, %20 : vector<8x1xf32>
      %cst_14 = arith.constant 0.000000e+00 : f32
      %22 = vector.broadcast %cst_14 : f32 to vector<8x1xf32>
      %23 = arith.maximumf %21, %22 : vector<8x1xf32>
      %cst_15 = arith.constant 9.99999974E-6 : f32
      %24 = vector.broadcast %cst_15 : f32 to vector<8x1xf32>
      %25 = arith.addf %23, %24 : vector<8x1xf32>
      %26 = math.rsqrt %25 : vector<8x1xf32>
      %27 = vector.broadcast %17 : vector<8x1xf32> to vector<8x32xf32>
      %28 = arith.subf %10, %27 : vector<8x32xf32>
      %29 = vector.broadcast %26 : vector<8x1xf32> to vector<8x32xf32>
      %30 = arith.mulf %28, %29 : vector<8x32xf32>
      %31 = arith.truncf %30 : vector<8x32xf32> to vector<8x32xbf16>
      %c0_16 = arith.constant 0 : index
      %c0_17 = arith.constant 0 : index
      %32 = vector.load %arg6[%c0_16, %c0_17] : memref<8x32xbf16, #tpu.memory_space<vmem>>, vector<8x32xbf16>
      tpu.vector_store %arg6[%c0_16, %c0_17], %31 {strides = array<i32>} : memref<8x32xbf16, #tpu.memory_space<vmem>>, vector<8x32xbf16>,
    } else {
    }
    %c0 = arith.constant 0 : index
    %c0_1 = arith.constant 0 : index
    %3 = vector.load %arg6[%c0, %c0_1] : memref<8x32xbf16, #tpu.memory_space<vmem>>, vector<8x32xbf16>
    %c0_2 = arith.constant 0 : index
    %c0_3 = arith.constant 0 : index
    %4 = vector.load %arg3[%c0_2, %c0_3] : memref<32x32xbf16, #tpu.memory_space<vmem>>, vector<32x32xbf16>
    %cst = arith.constant dense<0.000000e+00> : vector<8x32xf32>
    %5 = tpu.matmul %3, %4, %cst {dimension_numbers = #tpu.dot_dimension_numbers<[1], [0], [0], [1], [0, 0, 1, 1], [], []>} : vector<8x32xbf16>, vector<32x32xbf16>, vector<8x32xf32> -> vector<8x32xf32>
    %c0_4 = arith.constant 0 : index
    %c0_5 = arith.constant 0 : index
    %6 = vector.load %arg4[%c0_4, %c0_5] : memref<1x32xf32, #tpu.memory_space<vmem>>, vector<1x32xf32>
    %7 = vector.broadcast %6 : vector<1x32xf32> to vector<8x32xf32>
    %8 = arith.addf %5, %7 : vector<8x32xf32>
    %c0_6 = arith.constant 0 : index
    %c0_7 = arith.constant 0 : index
    %9 = vector.load %arg5[%c0_6, %c0_7] : memref<8x32xf32, #tpu.memory_space<vmem>>, vector<8x32xf32>
    tpu.vector_store %arg5[%c0_6, %c0_7], %8 {strides = array<i32>} : memref<8x32xf32, #tpu.memory_space<vmem>>, vector<8x32xf32>,
    return
  }
  func.func @transform_0(%arg0: i32, %arg1: i32) -> (i32, i32) {
    %c0_i32 = arith.constant 0 : i32
    %c0_i32_0 = arith.constant 0 : i32
    return %arg0, %c0_i32 : i32, i32
  }
  func.func @transform_1(%arg0: i32, %arg1: i32) -> (i32, i32) {
    %c0_i32 = arith.constant 0 : i32
    %c0_i32_0 = arith.constant 0 : i32
    return %c0_i32, %arg1 : i32, i32
  }
  func.func @transform_2(%arg0: i32, %arg1: i32) -> (i32, i32) {
    %c0_i32 = arith.constant 0 : i32
    %c0_i32_0 = arith.constant 0 : i32
    return %c0_i32, %arg1 : i32, i32
  }
  func.func @transform_3(%arg0: i32, %arg1: i32) -> (i32, i32) {
    %c0_i32 = arith.constant 0 : i32
    return %arg0, %arg1 : i32, i32
  }
}

</mosaic_0001>

<llo_original>
// kernel: tpu_custom_call.1
$region0: #{tpu_custom_call.1}
  #allocation0 [shape = 'u32[]', space=smem, size = 0x4, offset = 0x4, fixed_abs, tag = 'smem constant byte address 0x4 - core index']
  #allocation1 [shape = 'u32[144,128]{1,0:T(1,128)}', space=vmem, size = 0x12000, scoped, tag = 'internal scratch']
  #allocation2 [shape = 'bf16[8,32]{1,0:T(8,128)(2,1)}', space=vmem, size = 0x800, scoped, tag = 'scratch operand']
  %s0 = inlined_call_operand.hbm [shape: f32[16,32], index: 0, kind: input, shape index: {}]
  %s1 = inlined_call_operand.hbm [shape: bf16[32,32], index: 1, kind: input, shape index: {}]
  %s2 = inlined_call_operand.vmem [shape: f32[1,32], index: 2, kind: input, shape index: {}]
  %s3 = inlined_call_operand.hbm [shape: f32[16,32], index: 3, kind: output, shape index: {}]
  %s4 = sld [smem:[#allocation0]]
  $region57: #{tpu_custom_call.1} parent=0
    _
  %s6 = ssub.s32 1, %s4
  %s7 = scalar_select 0, %s6, %s4
  $region1: #{tpu_custom_call.1} parent=0
    #allocation3 [shape = 'u8[8192]{0}', space=vmem, size = 0x2000, scoped, tag = 'input window, operand 0']
    #allocation4 [shape = 's32[2]{0}', space=sflag, size = 0x8, scoped, tag = 'scoped memory for tpu_custom_call.1']
    #allocation5 [shape = 's32[2]{0}', space=sflag, size = 0x8, scoped, tag = 'scoped memory for tpu_custom_call.1']
    #allocation6 [shape = 'u8[8192]{0}', space=vmem, size = 0x2000, scoped, tag = 'input window, operand 1, single buffered']
    #allocation7 [shape = 's32[1]{0}', space=sflag, size = 0x4, scoped, tag = 'scoped memory for tpu_custom_call.1']
    #allocation8 [shape = 'u8[8192]{0}', space=vmem, size = 0x2000, scoped, tag = 'output window, operand 0']
    %8 = vsyncpa [#allocation4], 0
    %s9 = scalar_lea.sflag [#allocation4], 1
    %10 = vsyncpa %s9, 0
    %11 = vsyncpa [#allocation7], 0
    %12 = vsyncpa [#allocation5], 0
    %s13 = scalar_lea.sflag [#allocation5], 1
    %14 = vsyncpa %s13, 0
    loop: start=0, step=1, limit=4
    $region2: #{tpu_custom_call.1} parent=1 // loop_pre_header
      _
    $region3: #{tpu_custom_call.1} parent=1 // loop_header
      %s16 = sphi 0, %s20
      %p17 = scmp.ge.s32.totalorder %s16, 4
      %s23 = sphi 0, %s35
      %s24 = sphi 0, %s31
      %s25 = sphi 0, %s23
      %s26 = sphi 0, %s24
      %s27 = sphi 0, %s25
      %s28 = sphi 0, %s26
      %s38 = sphi 0, %s40
      %s41 = sphi 0, %s38
      %s42 = sphi 0, %s41
      %s58 = sphi 0, %s42
      %s64 = sphi 0, %s66
      %s67 = sphi 0, %s64
      %s68 = sphi 0, %s67
      %s84 = sphi 0, %s68
      %s90 = sphi 0, %s92
      %s93 = sphi 0, %s90
      %s94 = sphi 0, %s93
      %s110 = sphi 0, %s94
      %s118 = sphi 0, %s120
      %s121 = sphi 0, %s118
      %s122 = sphi 0, %s121
      %s138 = sphi 0, %s122
    $region4: #{tpu_custom_call.1} parent=1 // loop_header_branch
      %19 = sbr.rel (%p17) target = $region8
    $region5: #{tpu_custom_call.1} parent=1 // loop_body
      %s21 = ssub.s32 %s16, 1
      %s22 = ssub.s32 %s16, 2
      %s29 = sadd.s32 1, %s24
      %p30 = scmp.ge.s32.totalorder %s29, 1
      %s31 = scalar_select %p30, 0, %s29
      %s32 = sadd.s32 1, %s23
      %s33 = scalar_select %p30, %s32, %s23
      %p34 = scmp.ge.s32.totalorder %s33, 2
      %s35 = scalar_select %p34, 0, %s33
      %s36 = ssub.s32 %s23, %s35
      %p37 = scmp.eq.s32.totalorder %s36, 0
      %s39 = sadd.s32 %s38, 1
      %s40 = scalar_select %p37, %s38, %s39
      %p43 = pneg %p37
      %p44 = scmp.eq.s32.totalorder %s16, 1
      %p45 = por %p43, %p44
      %p46 = scmp.ne.s32.totalorder %s38, %s41
      %p47 = scmp.eq.s32.totalorder %s16, 0
      %p48 = por %p46, %p47
      %p49 = scmp.ne.s32.totalorder %s38, %s41
      %p50 = scmp.eq.s32.totalorder %s21, 1
      %p51 = por %p49, %p50
      %p52 = scmp.ne.s32.totalorder %s41, %s42
      %p53 = scmp.eq.s32.totalorder %s21, 0
      %p54 = por %p52, %p53
      %p55 = scmp.ne.s32.totalorder %s41, %s42
      %p56 = scmp.eq.s32.totalorder %s22, 1
      %p57 = por %p55, %p56
      %p59 = scmp.ne.s32.totalorder %s42, %s58
      %p60 = scmp.eq.s32.totalorder %s22, 0
      %p61 = por %p59, %p60
      %s62 = ssub.s32 %s24, %s31
      %p63 = scmp.eq.s32.totalorder %s62, 0
      %s65 = sadd.s32 %s64, 1
      %s66 = scalar_select %p63, %s64, %s65
      %p69 = pneg %p63
      %p70 = scmp.eq.s32.totalorder %s16, 1
      %p71 = por %p69, %p70
      %p72 = scmp.ne.s32.totalorder %s64, %s67
      %p73 = scmp.eq.s32.totalorder %s16, 0
      %p74 = por %p72, %p73
      %p75 = scmp.ne.s32.totalorder %s64, %s67
      %p76 = scmp.eq.s32.totalorder %s21, 1
      %p77 = por %p75, %p76
      %p78 = scmp.ne.s32.totalorder %s67, %s68
      %p79 = scmp.eq.s32.totalorder %s21, 0
      %p80 = por %p78, %p79
      %p81 = scmp.ne.s32.totalorder %s67, %s68
      %p82 = scmp.eq.s32.totalorder %s22, 1
      %p83 = por %p81, %p82
      %p85 = scmp.ne.s32.totalorder %s68, %s84
      %p86 = scmp.eq.s32.totalorder %s22, 0
      %p87 = por %p85, %p86
      %s88 = ssub.s32 %s24, %s31
      %p89 = scmp.eq.s32.totalorder %s88, 0
      %s91 = sadd.s32 %s90, 1
      %s92 = scalar_select %p89, %s90, %s91
      %p95 = pneg %p89
      %p96 = scmp.eq.s32.totalorder %s16, 1
      %p97 = por %p95, %p96
      %p98 = scmp.ne.s32.totalorder %s90, %s93
      %p99 = scmp.eq.s32.totalorder %s16, 0
      %p100 = por %p98, %p99
      %p101 = scmp.ne.s32.totalorder %s90, %s93
      %p102 = scmp.eq.s32.totalorder %s21, 1
      %p103 = por %p101, %p102
      %p104 = scmp.ne.s32.totalorder %s93, %s94
      %p105 = scmp.eq.s32.totalorder %s21, 0
      %p106 = por %p104, %p105
      %p107 = scmp.ne.s32.totalorder %s93, %s94
      %p108 = scmp.eq.s32.totalorder %s22, 1
      %p109 = por %p107, %p108
      %p111 = scmp.ne.s32.totalorder %s94, %s110
      %p112 = scmp.eq.s32.totalorder %s22, 0
      %p113 = por %p111, %p112
      %s114 = ssub.s32 %s23, %s35
      %s115 = ssub.s32 %s24, %s31
      %s116 = sor.u32 %s114, %s115
      %p117 = scmp.eq.s32.totalorder %s116, 0
      %s119 = sadd.s32 %s118, 1
      %s120 = scalar_select %p117, %s118, %s119
      %p123 = pneg %p117
      %p124 = scmp.eq.s32.totalorder %s16, 1
      %p125 = por %p123, %p124
      %p126 = scmp.ne.s32.totalorder %s118, %s121
      %p127 = scmp.eq.s32.totalorder %s16, 0
      %p128 = por %p126, %p127
      %p129 = scmp.ne.s32.totalorder %s118, %s121
      %p130 = scmp.eq.s32.totalorder %s21, 1
      %p131 = por %p129, %p130
      %p132 = scmp.ne.s32.totalorder %s121, %s122
      %p133 = scmp.eq.s32.totalorder %s21, 0
      %p134 = por %p132, %p133
      %p135 = scmp.ne.s32.totalorder %s121, %s122
      %p136 = scmp.eq.s32.totalorder %s22, 1
      %p137 = por %p135, %p136
      %p139 = scmp.ne.s32.totalorder %s122, %s138
      %p140 = scmp.eq.s32.totalorder %s22, 0
      %p141 = por %p139, %p140
      %p142 = scmp.le.s32.totalorder 1, %s16
      %p143 = scmp.lt.s32.totalorder %s16, 3
      %p144 = pnand %p142, %p143
      %p145 = pneg %p144
      // Predicated region
      $region9: #{tpu_custom_call.1} parent=5 // pred_check
        _
      $region10: #{tpu_custom_call.1} parent=5 // pred_check_branch
        %147 = sbr.rel (%p144) target = $region12
      $region11: #{tpu_custom_call.1} parent=5 // pred_region
        %s148 = ssub.s32 %s16, 1
        // Predicated region
        $region13: #{tpu_custom_call.1} parent=11 // pred_check
          %p149 = pneg %p80
        $region14: #{tpu_custom_call.1} parent=11 // pred_check_branch
          %151 = sbr.rel (%p149) target = $region16
        $region15: #{tpu_custom_call.1} parent=11 // pred_region
          %s153 = ssub.s32 256, 256
          %154 = vsyncadd [#allocation7], %s153
          %s155 = smul.addr %s26, 64
          %s156 = scalar_lea.hbm %s1, %s155
          %s157 = sshll.u32 [#allocation6], 4
          %s158 = int_to_ptr.vmem [resolvable:$true] %s157
          %163 = dma.hbm_to_vmem [thread:$0]  %s156, 256, %s158, [#allocation7], 64, 64, 4
        $region16: #{tpu_custom_call.1} parent=11 // pred_fallthru
          _
        // Predicated region
        $region17: #{tpu_custom_call.1} parent=11 // pred_check
          %p164 = pneg %p106
        $region18: #{tpu_custom_call.1} parent=11 // pred_check_branch
          %166 = sbr.rel (%p164) target = $region20
        $region19: #{tpu_custom_call.1} parent=11 // pred_region
          %p167 = scmp.lt.s32.totalorder %s26, 0
          %s168 = scalar_select %p167, %s26, 0
          %s169 = scalar_lea.vmem %s2, %s168
        $region20: #{tpu_custom_call.1} parent=11 // pred_fallthru
          _
      $region12: #{tpu_custom_call.1} parent=5 // pred_fallthru
        _
      %p170 = scmp.lt.s32.totalorder %s16, 2
      // Predicated region
      $region21: #{tpu_custom_call.1} parent=5 // pred_check
        %p171 = pneg %p170
      $region22: #{tpu_custom_call.1} parent=5 // pred_check_branch
        %173 = sbr.rel (%p171) target = $region24
      $region23: #{tpu_custom_call.1} parent=5 // pred_region
        // Predicated region
        $region25: #{tpu_custom_call.1} parent=23 // pred_check
          %p174 = pneg %p48
        $region26: #{tpu_custom_call.1} parent=23 // pred_check_branch
          %176 = sbr.rel (%p174) target = $region28
        $region27: #{tpu_custom_call.1} parent=23 // pred_region
          %s177 = sand.u32 %s38, 1
          %s178 = scalar_lea.sflag [#allocation4], %s177
          %s179 = sand.u32 %s38, 1
          %s180 = smul.addr %s179, 8
          %s181 = scalar_lea.vmem [#allocation3], %s180
          %s183 = ssub.s32 128, 128
          %184 = vsyncadd %s178, %s183
          %s185 = smul.addr %s23, 128
          %s186 = scalar_lea.hbm %s0, %s185
          %s188 = sshll.u32 %s181, 4
          %s189 = int_to_ptr.vmem [resolvable:$true] %s188
          %191 = dma.hbm_to_vmem [thread:$0]  %s186, 128, %s189, %s178
        $region28: #{tpu_custom_call.1} parent=23 // pred_fallthru
          _
      $region24: #{tpu_custom_call.1} parent=5 // pred_fallthru
        _
      %p192 = scmp.le.s32.totalorder 1, %s16
      %p193 = scmp.lt.s32.totalorder %s16, 3
      %p194 = pnand %p192, %p193
      %p195 = pneg %p194
      // Predicated region
      $region29: #{tpu_custom_call.1} parent=5 // pred_check
        _
      $region30: #{tpu_custom_call.1} parent=5 // pred_check_branch
        %197 = sbr.rel (%p194) target = $region32
      $region31: #{tpu_custom_call.1} parent=5 // pred_region
        %s198 = ssub.s32 %s16, 1
        %s199 = sand.u32 %s41, 1
        %s200 = scalar_lea.sflag [#allocation4], %s199
        %s201 = sand.u32 %s41, 1
        %s202 = smul.addr %s201, 8
        %s203 = scalar_lea.vmem [#allocation3], %s202
        // Predicated region
        $region33: #{tpu_custom_call.1} parent=31 // pred_check
          %p204 = pneg %p54
        $region34: #{tpu_custom_call.1} parent=31 // pred_check_branch
          %206 = sbr.rel (%p204) target = $region36
        $region35: #{tpu_custom_call.1} parent=31 // pred_region
          %207 = dma.done %s200, 128
        $region36: #{tpu_custom_call.1} parent=31 // pred_fallthru
          _
        // Predicated region
        $region37: #{tpu_custom_call.1} parent=31 // pred_check
          %p208 = pneg %p80
        $region38: #{tpu_custom_call.1} parent=31 // pred_check_branch
          %210 = sbr.rel (%p208) target = $region40
        $region39: #{tpu_custom_call.1} parent=31 // pred_region
          %211 = dma.done [#allocation7], 256
        $region40: #{tpu_custom_call.1} parent=31 // pred_fallthru
          _
        %s212 = sand.u32 %s41, 1
        %s213 = scalar_lea.sflag [#allocation4], %s212
        %s214 = sand.u32 %s41, 1
        %s215 = smul.addr %s214, 8
        %s216 = scalar_lea.vmem [#allocation3], %s215
        %p217 = pneg %p54
        %p218 = pneg %p51
        %p219 = pneg %p80
        %p220 = pneg %p77
        %p221 = scmp.lt.s32.totalorder %s26, 0
        %s222 = scalar_select %p221, %s26, 0
        %s223 = scalar_lea.vmem %s2, %s222
        %p224 = pneg %p106
        %p225 = pneg %p103
        %p226 = pneg %p134
        %p227 = pneg %p131
        %s228 = sand.u32 %s121, 1
        %s229 = scalar_lea.sflag [#allocation5], %s228
        %s230 = sand.u32 %s121, 1
        %s231 = smul.addr %s230, 8
        %s232 = scalar_lea.vmem [#allocation8], %s231
        %p233 = scmp.lt.s32.totalorder %s26, 0
        %s234 = scalar_select %p233, %s26, 0
        %s235 = scalar_lea.vmem %s2, %s234
        %p237 = scmp.eq.s32.totalorder %s26, 0
        // Predicated region
        $region41: #{tpu_custom_call.1} parent=31 // pred_check
          %p238 = pneg %p237
        $region42: #{tpu_custom_call.1} parent=31 // pred_check_branch
          %240 = sbr.rel (%p238) target = $region44
        $region43: #{tpu_custom_call.1} parent=31 // pred_region
          %v241 = vld [vmem:[%s203] sm:$0xff]
          %vm242 = vcmask 261120
          %v243 = vsel %vm242, %v241, 0.0
          %244 = vadd.xlane.f32.xlu0 %v243
          %v245 = vpop.xlane.xlu0 %244
          %v246 = vmul.f32 %v241, %v241
          %v247 = vsel %vm242, %v246, 0.0
          %248 = vadd.xlane.f32.xlu0 %v247
          %v249 = vpop.xlane.xlu0 %248
          %v250 = vmul.f32 %v245, 0.03125
          %v251 = vmul.f32 %v249, 0.03125
          %v252 = vmul.f32 %v250, %v250
          %v253 = vsub.f32 %v251, %v252
          %v254 = vmax.f32 %v253, 0.0
          %v255 = vadd.f32 %v254, 1e-05
          %v256 = vrsqrt.pop %v255
          %v257 = vsub.f32 %v241, %v250
          %v258 = vmul.f32 %v257, %v256
          %v259 = vpack.c.bf16 %v258, %v258
          %vm260 = vcmask 257024
          %261 = vst.msk [vmem:[#allocation2] sm:$0xf] %vm260, %v259
        $region44: #{tpu_custom_call.1} parent=31 // pred_fallthru
          _
        %v262 = vld [vmem:[#allocation2] sm:$0xf]
        %v263 = vld [vmem:[#allocation6] sm:$0xf]
        %v264 = vld [vmem:[#allocation6 + $0x4] sm:$0xf]
        %v265 = vld [vmem:[#allocation6 + $0x8] sm:$0xf]
        %v266 = vld [vmem:[#allocation6 + $0xc] sm:$0xf]
        %v267 = vld [vmem:[%s235] sm:$0x1]
        %v269 = vlaneseq
        %v270 = vshrl.u32 %v269, 7
        %v271 = vsub.s32 0, %v270
        %v272 = vrot.slane %v267, %v271
        %v278 = vunpack.c.l.b16 %v263
        %v279 = vunpack.c.l.b16 %v264
        %v280 = vunpack.c.l.b16 %v265
        %v281 = vunpack.c.l.b16 %v266
        %v282 = vpack.c.b16 %v279, %v278
        %v283 = vpack.c.b16 %v281, %v280
        %vm286 = vcmask 261120
        %v288 = vsel %vm286, %v262, 0
        %290 = vmatprep.subr.bf16.mxu0 0
        %291 = vmatpush1.bf16.msra.mxu0 %v282
        %292 = vmatprep.subr.bf16.mxu0 0
        %293 = vmatpush1.bf16.msra.mxu0 %v283
        %294 = vmatprep.subr.bf16.mxu0 0
        %295 = vmatpush1.bf16.msra.mxu0 0
        %296 = vmatprep.subr.bf16.mxu0 0
        %297 = vmatpush1.bf16.msra.mxu0 0
        %298 = vmatprep.subr.bf16.mxu0 0
        %299 = vmatpush1.bf16.msra.mxu0 0
        %300 = vmatprep.subr.bf16.mxu0 0
        %301 = vmatpush1.bf16.msra.mxu0 0
        %302 = vmatprep.subr.bf16.mxu0 0
        %303 = vmatpush1.bf16.msra.mxu0 0
        %304 = vmatprep.subr.bf16.mxu0 0
        %305 = vmatpush1.bf16.msra.mxu0 0
        %306 = vmatprep.subr.bf16.mxu0 0
        %307 = vmatpush1.bf16.msra.mxu0 0
        %308 = vmatprep.subr.bf16.mxu0 0
        %309 = vmatpush1.bf16.msra.mxu0 0
        %310 = vmatprep.subr.bf16.mxu0 0
        %311 = vmatpush1.bf16.msra.mxu0 0
        %312 = vmatprep.subr.bf16.mxu0 0
        %313 = vmatpush1.bf16.msra.mxu0 0
        %314 = vmatprep.subr.bf16.mxu0 0
        %315 = vmatpush1.bf16.msra.mxu0 0
        %316 = vmatprep.subr.bf16.mxu0 0
        %317 = vmatpush1.bf16.msra.mxu0 0
        %318 = vmatprep.subr.bf16.mxu0 0
        %319 = vmatpush1.bf16.msra.mxu0 0
        %320 = vmatprep.subr.bf16.mxu0 0
        %321 = vmatpush1.bf16.msra.mxu0 0
        %322 = vmatprep.mubr.bf16.mxu0 0
        %323 = vmatmul.mubr.bf16.gmra.mrb[0].mxu0 %v288
        %v324 = vpop.f32.mrb[0].mxu0
        %v325 = vadd.f32 %v272, %v324
        %v326 = vpop.f32.mrb[0].mxu0
        %v327 = vpop.f32.mrb[0].mxu0
        %v328 = vpop.f32.mrb[0].mxu0
        %329 = vdwg.mxu0
        %330 = vst.msk [vmem:[%s232] sm:$0xff] %vm286, %v325
        %s331 = sand.u32 %s121, 1
        %s332 = scalar_lea.sflag [#allocation5], %s331
        %s333 = sand.u32 %s121, 1
        %s334 = smul.addr %s333, 8
        %s335 = scalar_lea.vmem [#allocation8], %s334
        // Predicated region
        $region45: #{tpu_custom_call.1} parent=31 // pred_check
          %p336 = pneg %p131
        $region46: #{tpu_custom_call.1} parent=31 // pred_check_branch
          %338 = sbr.rel (%p336) target = $region48
        $region47: #{tpu_custom_call.1} parent=31 // pred_region
          %s340 = ssub.s32 128, 128
          %341 = vsyncadd %s332, %s340
          %s342 = sadd.s32 %s26, %s25
          %s343 = smul.addr %s342, 128
          %s344 = scalar_lea.hbm %s3, %s343
          %s346 = sshll.u32 %s335, 4
          %s347 = int_to_ptr.vmem [resolvable:$true] %s346
          %349 = dma.vmem_to_hbm [thread:$0]  %s347, 128, %s344, %s332
        $region48: #{tpu_custom_call.1} parent=31 // pred_fallthru
          _
      $region32: #{tpu_custom_call.1} parent=5 // pred_fallthru
        _
      %p350 = scmp.le.s32.totalorder 2, %s16
      // Predicated region
      $region49: #{tpu_custom_call.1} parent=5 // pred_check
        %p351 = pneg %p350
      $region50: #{tpu_custom_call.1} parent=5 // pred_check_branch
        %353 = sbr.rel (%p351) target = $region52
      $region51: #{tpu_custom_call.1} parent=5 // pred_region
        %s354 = ssub.s32 %s16, 2
        // Predicated region
        $region53: #{tpu_custom_call.1} parent=51 // pred_check
          %p355 = pneg %p137
        $region54: #{tpu_custom_call.1} parent=51 // pred_check_branch
          %357 = sbr.rel (%p355) target = $region56
        $region55: #{tpu_custom_call.1} parent=51 // pred_region
          %s358 = sand.u32 %s122, 1
          %s359 = scalar_lea.sflag [#allocation5], %s358
          %s360 = sand.u32 %s122, 1
          %s361 = smul.addr %s360, 8
          %s362 = scalar_lea.vmem [#allocation8], %s361
          %363 = dma.done %s359, 128
        $region56: #{tpu_custom_call.1} parent=51 // pred_fallthru
          _
      $region52: #{tpu_custom_call.1} parent=5 // pred_fallthru
        _
    $region6: #{tpu_custom_call.1} parent=1 // loop_footer
      %s20 = sadd.s32 1, %s16
    $region7: #{tpu_custom_call.1} parent=1 // loop_footer_branch
      %15 = sbr.rel target = $region3
    $region8: #{tpu_custom_call.1} parent=1 // loop_exit
      _
    %364 = vsyncpa [#allocation4], 1
    %s365 = scalar_lea.sflag [#allocation4], 1
    %366 = vsyncpa %s365, 1
    %367 = vsyncpa [#allocation7], 1
    %368 = vsyncpa [#allocation5], 1
    %s369 = scalar_lea.sflag [#allocation5], 1
    %370 = vsyncpa %s369, 1

</llo_original>
